<compile_context>
chip_gen: v7x
topology: tpu7x:2x2x1
jax: 0.10.0
libtpu: 0.0.40
codegen_flags: <defaults>
</compile_context>

<pallas_src>
import jax
import jax.numpy as jnp
from jax.experimental import pallas as pl
from jax.experimental.pallas import tpu as pltpu


def _round_up(n, m):
    return ((n + m - 1) // m) * m


# --------------------------------------------------------------------------
# Kernel
# --------------------------------------------------------------------------
def make_encoder_kernel(input_dim, h1, h2, latent2, offs):
    """offs = sublane-aligned row offsets of (w1, b1, w2, b2, w_head, b_head)
    inside the packed parameter slab."""
    o_w1, o_b1, o_w2, o_b2, o_wh, o_bh = offs

    def kernel(x_ref, p_ref, out_ref):
        x = x_ref[...]                                        # (TM, input_dim) f32

        # ---- hidden layer 1: Linear + ReLU ----
        if input_dim <= 8:
            # K is tiny: keep it off the MXU; broadcast-FMA on the (otherwise
            # idle) VPU shortens the dependency chain feeding layer 2.
            h = x[:, 0:1] * p_ref[o_w1:o_w1 + 1, 0:h1]
            for k in range(1, input_dim):
                h = h + x[:, k:k + 1] * p_ref[o_w1 + k:o_w1 + k + 1, 0:h1]
        else:
            h = jnp.dot(x, p_ref[o_w1:o_w1 + input_dim, 0:h1],
                        preferred_element_type=jnp.float32)
        h = jnp.maximum(h + p_ref[o_b1:o_b1 + 1, 0:h1], 0.0)

        # ---- hidden layer 2: Linear + ReLU (MXU) ----
        h = jnp.dot(h, p_ref[o_w2:o_w2 + h1, 0:h2],
                    preferred_element_type=jnp.float32)
        h = jnp.maximum(h + p_ref[o_b2:o_b2 + 1, 0:h2], 0.0)

        # ---- fused mu|logvar head: one matmul, one packed store ----
        out = jnp.dot(h, p_ref[o_wh:o_wh + h2, 0:latent2],
                      preferred_element_type=jnp.float32)
        out = out + p_ref[o_bh:o_bh + 1, 0:latent2]
        out_ref[...] = out.astype(out_ref.dtype)

    return kernel


# --------------------------------------------------------------------------
# Parameter packing: one contiguous (rows, LANES) f32 slab -> one DMA
# --------------------------------------------------------------------------
def pack_params(params):
    """params = (w1, b1, w2, b2, wmu, bmu, wlv, blv); weights are (in, out)."""
    w1, b1, w2, b2, wmu, bmu, wlv, blv = params
    input_dim, h1 = w1.shape
    h2 = w2.shape[1]
    latent = wmu.shape[1]

    # Fuse the two heads: wh = [wmu | wlv], bh = [bmu | blv].
    wh = jnp.concatenate([wmu, wlv], axis=1)      # (h2, 2*latent)
    bh = jnp.concatenate([bmu, blv], axis=1)      # (1,  2*latent)

    blocks = [w1, b1, w2, b2, wh, bh]
    lanes = _round_up(max(h1, h2, 2 * latent), 128)

    offs, rows = [], 0
    for blk in blocks:
        offs.append(rows)
        rows += _round_up(blk.shape[0], 8)        # keep every block sublane-aligned
    total_rows = _round_up(rows, 8)

    slab = jnp.zeros((total_rows, lanes), dtype=jnp.float32)
    for off, blk in zip(offs, blocks):
        slab = slab.at[off:off + blk.shape[0], 0:blk.shape[1]].set(
            blk.astype(jnp.float32))

    dims = (input_dim, h1, h2, 2 * latent)
    return slab, tuple(offs), dims


# --------------------------------------------------------------------------
# Wrapper
# --------------------------------------------------------------------------
def encoder_forward(x, params, *, tm=None):
    """Returns (mu, logvar), matching the PyTorch Encoder.forward semantics."""
    slab, offs, dims = pack_params(params)
    input_dim, h1, h2, latent2 = dims

    x = x.astype(jnp.float32)
    B = x.shape[0]

    # Batch tile: multiple of 8; cap at 512 (amortizes per-step grid overhead
    # while staying far below v7x's 64 MiB VMEM even for wide inputs).
    if tm is None:
        tm = min(512, _round_up(B, 8))
    tm = _round_up(tm, 8)

    Bp = _round_up(B, tm)
    if Bp != B:
        x = jnp.pad(x, ((0, Bp - B), (0, 0)))

    kernel = make_encoder_kernel(input_dim, h1, h2, latent2, offs)

    packed = pl.pallas_call(
        kernel,
        grid=(Bp // tm,),
        in_specs=[
            # x: tiled over the batch axis, pipelined against HBM.
            pl.BlockSpec((tm, input_dim), lambda i: (i, 0)),
            # parameter slab: constant block index -> loaded once, stays resident.
            pl.BlockSpec(slab.shape, lambda i: (0, 0)),
        ],
        out_specs=pl.BlockSpec((tm, latent2), lambda i: (i, 0)),
        out_shape=jax.ShapeDtypeStruct((Bp, latent2), jnp.float32),
        compiler_params=pltpu.CompilerParams(
            dimension_semantics=("parallel",)),   # shard batch over TCs on v7x
    )(x, slab)

    packed = packed[:B]
    latent = latent2 // 2
    return packed[:, :latent], packed[:, latent:]


# --------------------------------------------------------------------------
# Init + pure-JAX reference
# --------------------------------------------------------------------------
def init_params(key, input_dim=2, hidden_dims=(64, 32), latent_dim=2,
                dtype=jnp.float32):
    """Deterministic synthetic init (shapes match nn.Linear layers, transposed)."""
    dims = [input_dim] + list(hidden_dims)
    params = []
    keys = jax.random.split(key, 2 * len(hidden_dims) + 4)
    ki = 0
    for i in range(len(hidden_dims)):
        fan_in, fan_out = dims[i], dims[i + 1]
        bound = 1.0 / jnp.sqrt(fan_in)
        w = jax.random.uniform(keys[ki], (fan_in, fan_out), dtype, -bound, bound); ki += 1
        b = jax.random.uniform(keys[ki], (1, fan_out), dtype, -bound, bound); ki += 1
        params.extend([w, b])
    fan_in = dims[-1]
    bound = 1.0 / jnp.sqrt(fan_in)
    wmu = jax.random.uniform(keys[ki], (fan_in, latent_dim), dtype, -bound, bound); ki += 1
    bmu = jax.random.uniform(keys[ki], (1, latent_dim), dtype, -bound, bound); ki += 1
    wlv = jax.random.uniform(keys[ki], (fan_in, latent_dim), dtype, -bound, bound); ki += 1
    blv = jax.random.uniform(keys[ki], (1, latent_dim), dtype, -bound, bound); ki += 1
    params.extend([wmu, bmu, wlv, blv])
    return tuple(params)


def reference_forward(x, params):
    w1, b1, w2, b2, wmu, bmu, wlv, blv = params
    h = jnp.maximum(x @ w1 + b1, 0.0)
    h = jnp.maximum(h @ w2 + b2, 0.0)
    return h @ wmu + bmu, h @ wlv + blv


# --------------------------------------------------------------------------
if __name__ == "__main__":
    key = jax.random.PRNGKey(0)
    k_param, k_x1, k_x2 = jax.random.split(key, 3)

    input_dim, hidden_dims, latent_dim = 2, (64, 32), 2
    params = init_params(k_param, input_dim, hidden_dims, latent_dim)

    # Small primary test (single grid step).
    x = jax.random.normal(k_x1, (8, input_dim), dtype=jnp.float32)
    mu, logvar = encoder_forward(x, params)
    jax.block_until_ready((mu, logvar))
    mu_ref, lv_ref = reference_forward(x, params)
    assert mu.shape == (8, latent_dim) and logvar.shape == (8, latent_dim)
    assert jnp.allclose(mu, mu_ref, atol=1e-5, rtol=1e-5)
    assert jnp.allclose(logvar, lv_ref, atol=1e-5, rtol=1e-5)

    # Second test: exercises multi-step batch grid + edge padding.
    x2 = jax.random.normal(k_x2, (200, input_dim), dtype=jnp.float32)
    mu2, lv2 = encoder_forward(x2, params, tm=64)   # 200 -> pad to 256, grid=(4,)
    jax.block_until_ready((mu2, lv2))
    mu2_ref, lv2_ref = reference_forward(x2, params)
    assert mu2.shape == (200, latent_dim) and lv2.shape == (200, latent_dim)
    assert jnp.allclose(mu2, mu2_ref, atol=1e-5, rtol=1e-5)
    assert jnp.allclose(lv2, lv2_ref, atol=1e-5, rtol=1e-5)

    print("KERNEL_OK")
</pallas_src>

<mosaic_0001>
module attributes {stable_mosaic.version = 11 : i64} {
  func.func @kernel(%arg0: i32, %arg1: memref<8x2xf32, #tpu.memory_space<vmem>>, %arg2: memref<128x128xf32, #tpu.memory_space<vmem>>, %arg3: memref<8x4xf32, #tpu.memory_space<vmem>>) attributes {dimension_semantics = [#tpu.dimension_semantics<parallel>], iteration_bounds = array<i64: 1>, scalar_prefetch = 0 : i64, scratch_operands = 0 : i64, tpu.core_type = #tpu.core_type<tc>, window_params = [{transform_indices = @transform_0, window_bounds = array<i64: 8, 2>}, {pipeline_mode = #tpu.pipeline_mode<synchronous>, transform_indices = @transform_1, window_bounds = array<i64: 128, 128>}, {transform_indices = @transform_2, window_bounds = array<i64: 8, 4>}]} {
    %c0 = arith.constant 0 : index
    %c0_0 = arith.constant 0 : index
    %0 = vector.load %arg1[%c0, %c0_0] : memref<8x2xf32, #tpu.memory_space<vmem>>, vector<8x2xf32>
    %1 = vector.extract_strided_slice %0 {offsets = [0, 0], sizes = [8, 1], strides = [1, 1]} : vector<8x2xf32> to vector<8x1xf32>
    %c0_1 = arith.constant 0 : index
    %c0_2 = arith.constant 0 : index
    %2 = vector.load %arg2[%c0_1, %c0_2] : memref<128x128xf32, #tpu.memory_space<vmem>>, vector<1x64xf32>
    %3 = vector.broadcast %1 : vector<8x1xf32> to vector<8x64xf32>
    %4 = vector.broadcast %2 : vector<1x64xf32> to vector<8x64xf32>
    %5 = arith.mulf %3, %4 : vector<8x64xf32>
    %6 = vector.extract_strided_slice %0 {offsets = [0, 1], sizes = [8, 1], strides = [1, 1]} : vector<8x2xf32> to vector<8x1xf32>
    %c1 = arith.constant 1 : index
    %c0_3 = arith.constant 0 : index
    %7 = vector.load %arg2[%c1, %c0_3] : memref<128x128xf32, #tpu.memory_space<vmem>>, vector<1x64xf32>
    %8 = vector.broadcast %6 : vector<8x1xf32> to vector<8x64xf32>
    %9 = vector.broadcast %7 : vector<1x64xf32> to vector<8x64xf32>
    %10 = arith.mulf %8, %9 : vector<8x64xf32>
    %11 = arith.addf %5, %10 : vector<8x64xf32>
    %c8 = arith.constant 8 : index
    %c0_4 = arith.constant 0 : index
    %12 = vector.load %arg2[%c8, %c0_4] : memref<128x128xf32, #tpu.memory_space<vmem>>, vector<1x64xf32>
    %13 = vector.broadcast %12 : vector<1x64xf32> to vector<8x64xf32>
    %14 = arith.addf %11, %13 : vector<8x64xf32>
    %cst = arith.constant 0.000000e+00 : f32
    %15 = vector.broadcast %cst : f32 to vector<8x64xf32>
    %16 = arith.maximumf %14, %15 : vector<8x64xf32>
    %c16 = arith.constant 16 : index
    %c0_5 = arith.constant 0 : index
    %17 = vector.load %arg2[%c16, %c0_5] : memref<128x128xf32, #tpu.memory_space<vmem>>, vector<64x32xf32>
    %cst_6 = arith.constant dense<0.000000e+00> : vector<8x32xf32>
    %18 = tpu.matmul %16, %17, %cst_6 {dimension_numbers = #tpu.dot_dimension_numbers<[1], [0], [0], [1], [0, 0, 1, 1], [], []>} : vector<8x64xf32>, vector<64x32xf32>, vector<8x32xf32> -> vector<8x32xf32>
    %c80 = arith.constant 80 : index
    %c0_7 = arith.constant 0 : index
    %19 = vector.load %arg2[%c80, %c0_7] : memref<128x128xf32, #tpu.memory_space<vmem>>, vector<1x32xf32>
    %20 = vector.broadcast %19 : vector<1x32xf32> to vector<8x32xf32>
    %21 = arith.addf %18, %20 : vector<8x32xf32>
    %cst_8 = arith.constant 0.000000e+00 : f32
    %22 = vector.broadcast %cst_8 : f32 to vector<8x32xf32>
    %23 = arith.maximumf %21, %22 : vector<8x32xf32>
    %c88 = arith.constant 88 : index
    %c0_9 = arith.constant 0 : index
    %24 = vector.load %arg2[%c88, %c0_9] : memref<128x128xf32, #tpu.memory_space<vmem>>, vector<32x4xf32>
    %cst_10 = arith.constant dense<0.000000e+00> : vector<8x4xf32>
    %25 = tpu.matmul %23, %24, %cst_10 {dimension_numbers = #tpu.dot_dimension_numbers<[1], [0], [0], [1], [0, 0, 1, 1], [], []>} : vector<8x32xf32>, vector<32x4xf32>, vector<8x4xf32> -> vector<8x4xf32>
    %c120 = arith.constant 120 : index
    %c0_11 = arith.constant 0 : index
    %26 = vector.load %arg2[%c120, %c0_11] : memref<128x128xf32, #tpu.memory_space<vmem>>, vector<1x4xf32>
    %27 = vector.broadcast %26 : vector<1x4xf32> to vector<8x4xf32>
    %28 = arith.addf %25, %27 : vector<8x4xf32>
    %c0_12 = arith.constant 0 : index
    %c0_13 = arith.constant 0 : index
    %29 = vector.load %arg3[%c0_12, %c0_13] : memref<8x4xf32, #tpu.memory_space<vmem>>, vector<8x4xf32>
    tpu.vector_store %arg3[%c0_12, %c0_13], %28 {strides = array<i32>} : memref<8x4xf32, #tpu.memory_space<vmem>>, vector<8x4xf32>,
    return
  }
  func.func @transform_0(%arg0: i32) -> (i32, i32) {
    %c0_i32 = arith.constant 0 : i32
    %c0_i32_0 = arith.constant 0 : i32
    return %arg0, %c0_i32 : i32, i32
  }
  func.func @transform_1(%arg0: i32) -> (i32, i32) {
    %c0_i32 = arith.constant 0 : i32
    %c0_i32_0 = arith.constant 0 : i32
    %c0_i32_1 = arith.constant 0 : i32
    return %c0_i32, %c0_i32_0 : i32, i32
  }
  func.func @transform_2(%arg0: i32) -> (i32, i32) {
    %c0_i32 = arith.constant 0 : i32
    %c0_i32_0 = arith.constant 0 : i32
    return %arg0, %c0_i32 : i32, i32
  }
}

</mosaic_0001>

<llo_original>
// kernel: tpu_custom_call.1
$region0: #{tpu_custom_call.1}
  #allocation0 [shape = 'u32[]', space=smem, size = 0x4, offset = 0x4, fixed_abs, tag = 'smem constant byte address 0x4 - core index']
  #allocation1 [shape = 'u32[144,128]{1,0:T(1,128)}', space=vmem, size = 0x12000, scoped, tag = 'internal scratch']
  %s0 = inlined_call_operand.vmem [shape: f32[8,2], index: 0, kind: input, shape index: {}]
  %s1 = inlined_call_operand.hbm [shape: f32[128,128], index: 1, kind: input, shape index: {}]
  %s2 = inlined_call_operand.vmem [shape: f32[8,4], index: 2, kind: output, shape index: {}]
  %s3 = sld [smem:[#allocation0]]
  $region22: #{tpu_custom_call.1} parent=0
    _
  %s5 = ssub.s32 1, %s3
  %s6 = scalar_select 0, %s5, %s3
  $region1: #{tpu_custom_call.1} parent=0
    #allocation2 [shape = 'u8[65536]{0}', space=vmem, size = 0x10000, scoped, tag = 'input window, operand 1, single buffered']
    #allocation3 [shape = 's32[1]{0}', space=sflag, size = 0x4, scoped, tag = 'scoped memory for tpu_custom_call.1']
    %7 = vsyncpa [#allocation3], 0
    // Predicated region
    $region2: #{tpu_custom_call.1} parent=1 // pred_check
      _
    $region3: #{tpu_custom_call.1} parent=1 // pred_check_branch
      %9 = sbr.rel (0) target = $region5
    $region4: #{tpu_custom_call.1} parent=1 // pred_region
      _
    $region5: #{tpu_custom_call.1} parent=1 // pred_fallthru
      _
    // Predicated region
    $region6: #{tpu_custom_call.1} parent=1 // pred_check
      _
    $region7: #{tpu_custom_call.1} parent=1 // pred_check_branch
      %11 = sbr.rel (0) target = $region9
    $region8: #{tpu_custom_call.1} parent=1 // pred_region
      %s13 = ssub.s32 2048, 2048
      %14 = vsyncadd [#allocation3], %s13
      %s15 = sshll.u32 [#allocation2], 4
      %s16 = int_to_ptr.vmem [resolvable:$true] %s15
      %21 = dma.hbm_to_vmem [thread:$0]  %s1, 2048, %s16, [#allocation3], 128, 128, 8
    $region9: #{tpu_custom_call.1} parent=1 // pred_fallthru
      _
    // Predicated region
    $region10: #{tpu_custom_call.1} parent=1 // pred_check
      _
    $region11: #{tpu_custom_call.1} parent=1 // pred_check_branch
      %23 = sbr.rel (0) target = $region13
    $region12: #{tpu_custom_call.1} parent=1 // pred_region
      %24 = dma.done [#allocation3], 2048
    $region13: #{tpu_custom_call.1} parent=1 // pred_fallthru
      _
    %v25 = vld [vmem:[%s0] sm:$0xff]
    %v26 = vld [vmem:[#allocation2] sm:$0x1]
    %28 = vset.pattern.permute.xlu0 0
    %29 = vperm.xlu0 %28, %v25
    %v30 = vpop.permute.xlu0 %29
    %v32 = vlaneseq
    %v33 = vshrl.u32 %v32, 7
    %v34 = vsub.s32 0, %v33
    %v35 = vrot.slane %v26, %v34
    %v36 = vmul.f32 %v30, %v35
    %v37 = vld [vmem:[#allocation2 + $0x1] sm:$0x1]
    %38 = vset.pattern.permute.xlu0 1
    %39 = vperm.xlu0 %38, %v25
    %v40 = vpop.permute.xlu0 %39
    %v42 = vlaneseq
    %v43 = vshrl.u32 %v42, 7
    %v44 = vsub.s32 0, %v43
    %v45 = vrot.slane %v37, %v44
    %v46 = vmul.f32 %v40, %v45
    %v47 = vadd.f32 %v36, %v46
    %v48 = vld [vmem:[#allocation2 + $0x8] sm:$0x1]
    %v49 = vlaneseq
    %v50 = vshrl.u32 %v49, 7
    %v51 = vsub.s32 0, %v50
    %v52 = vrot.slane %v48, %v51
    %v53 = vadd.f32 %v47, %v52
    %v54 = vmax.f32 %v53, 0.0
    %v55 = vld [vmem:[#allocation2 + $0x10] sm:$0xff]
    %v56 = vld [vmem:[#allocation2 + $0x18] sm:$0xff]
    %v57 = vld [vmem:[#allocation2 + $0x20] sm:$0xff]
    %v58 = vld [vmem:[#allocation2 + $0x28] sm:$0xff]
    %v59 = vld [vmem:[#allocation2 + $0x30] sm:$0xff]
    %v60 = vld [vmem:[#allocation2 + $0x38] sm:$0xff]
    %v61 = vld [vmem:[#allocation2 + $0x40] sm:$0xff]
    %v62 = vld [vmem:[#allocation2 + $0x48] sm:$0xff]
    %v63 = vld [vmem:[#allocation2 + $0x50] sm:$0x1]
    %v64 = vlaneseq
    %v65 = vshrl.u32 %v64, 7
    %v66 = vsub.s32 0, %v65
    %v67 = vrot.slane %v63, %v66
    %vm68 = vcmask 523264
    %v70 = vsel %vm68, %v54, 0
    %72 = vmatprep.subr.mxu0 0.0
    %73 = vmatpush1.msra.mxu0 %v55
    %74 = vmatprep.subr.mxu0 0.0
    %75 = vmatpush1.msra.mxu0 %v56
    %76 = vmatprep.subr.mxu0 0.0
    %77 = vmatpush1.msra.mxu0 %v57
    %78 = vmatprep.subr.mxu0 0.0
    %79 = vmatpush1.msra.mxu0 %v58
    %80 = vmatprep.subr.mxu0 0.0
    %81 = vmatpush1.msra.mxu0 %v59
    %82 = vmatprep.subr.mxu0 0.0
    %83 = vmatpush1.msra.mxu0 %v60
    %84 = vmatprep.subr.mxu0 0.0
    %85 = vmatpush1.msra.mxu0 %v61
    %86 = vmatprep.subr.mxu0 0.0
    %87 = vmatpush1.msra.mxu0 %v62
    %88 = vmatprep.subr.mxu0 0.0
    %89 = vmatpush1.msra.mxu0 0.0
    %90 = vmatprep.subr.mxu0 0.0
    %91 = vmatpush1.msra.mxu0 0.0
    %92 = vmatprep.subr.mxu0 0.0
    %93 = vmatpush1.msra.mxu0 0.0
    %94 = vmatprep.subr.mxu0 0.0
    %95 = vmatpush1.msra.mxu0 0.0
    %96 = vmatprep.subr.mxu0 0.0
    %97 = vmatpush1.msra.mxu0 0.0
    %98 = vmatprep.subr.mxu0 0.0
    %99 = vmatpush1.msra.mxu0 0.0
    %100 = vmatprep.subr.mxu0 0.0
    %101 = vmatpush1.msra.mxu0 0.0
    %102 = vmatprep.subr.mxu0 0.0
    %103 = vmatpush1.msra.mxu0 0.0
    %104 = vmatprep.subr.mxu0 0.0
    %105 = vmatpush1.msra.mxu0 0.0
    %106 = vmatprep.subr.mxu0 0.0
    %107 = vmatpush1.msra.mxu0 0.0
    %108 = vmatprep.subr.mxu0 0.0
    %109 = vmatpush1.msra.mxu0 0.0
    %110 = vmatprep.subr.mxu0 0.0
    %111 = vmatpush1.msra.mxu0 0.0
    %112 = vmatprep.subr.mxu0 0.0
    %113 = vmatpush1.msra.mxu0 0.0
    %114 = vmatprep.subr.mxu0 0.0
    %115 = vmatpush1.msra.mxu0 0.0
    %116 = vmatprep.subr.mxu0 0.0
    %117 = vmatpush1.msra.mxu0 0.0
    %118 = vmatprep.subr.mxu0 0.0
    %119 = vmatpush1.msra.mxu0 0.0
    %120 = vmatprep.subr.mxu0 0.0
    %121 = vmatpush1.msra.mxu0 0.0
    %122 = vmatprep.subr.mxu0 0.0
    %123 = vmatpush1.msra.mxu0 0.0
    %124 = vmatprep.subr.mxu0 0.0
    %125 = vmatpush1.msra.mxu0 0.0
    %126 = vmatprep.subr.mxu0 0.0
    %127 = vmatpush1.msra.mxu0 0.0
    %128 = vmatprep.subr.mxu0 0.0
    %129 = vmatpush1.msra.mxu0 0.0
    %130 = vmatprep.subr.mxu0 0.0
    %131 = vmatpush1.msra.mxu0 0.0
    %132 = vmatprep.subr.mxu0 0.0
    %133 = vmatpush1.msra.mxu0 0.0
    %134 = vmatprep.subr.mxu0 0.0
    %135 = vmatpush1.msra.mxu0 0.0
    %136 = vmatprep.mubr.f32.mxu0 0.0
    %137 = vmatmul.mubr.f32.gmra.mrb[0].mxu0 %v70
    %v138 = vpop.f32.mrb[0].mxu0
    %v139 = vadd.f32 %v67, %v138
    %v140 = vpop.f32.mrb[0].mxu0
    %141 = vdwg.mxu0
    %v142 = vmax.f32 %v139, 0.0
    %v143 = vld [vmem:[#allocation2 + $0x58] sm:$0xff]
    %v144 = vld [vmem:[#allocation2 + $0x60] sm:$0xff]
    %v145 = vld [vmem:[#allocation2 + $0x68] sm:$0xff]
    %v146 = vld [vmem:[#allocation2 + $0x70] sm:$0xff]
    %v147 = vld [vmem:[#allocation2 + $0x78] sm:$0x1]
    %v148 = vlaneseq
    %v149 = vshrl.u32 %v148, 7
    %v150 = vsub.s32 0, %v149
    %v151 = vrot.slane %v147, %v150
    %vm152 = vcmask 261120
    %v154 = vsel %vm152, %v142, 0
    %156 = vmatprep.subr.mxu0 0.0
    %157 = vmatpush1.msra.mxu0 %v143
    %158 = vmatprep.subr.mxu0 0.0
    %159 = vmatpush1.msra.mxu0 %v144
    %160 = vmatprep.subr.mxu0 0.0
    %161 = vmatpush1.msra.mxu0 %v145
    %162 = vmatprep.subr.mxu0 0.0
    %163 = vmatpush1.msra.mxu0 %v146
    %164 = vmatprep.subr.mxu0 0.0
    %165 = vmatpush1.msra.mxu0 0.0
    %166 = vmatprep.subr.mxu0 0.0
    %167 = vmatpush1.msra.mxu0 0.0
    %168 = vmatprep.subr.mxu0 0.0
    %169 = vmatpush1.msra.mxu0 0.0
    %170 = vmatprep.subr.mxu0 0.0
    %171 = vmatpush1.msra.mxu0 0.0
    %172 = vmatprep.subr.mxu0 0.0
    %173 = vmatpush1.msra.mxu0 0.0
    %174 = vmatprep.subr.mxu0 0.0
    %175 = vmatpush1.msra.mxu0 0.0
    %176 = vmatprep.subr.mxu0 0.0
    %177 = vmatpush1.msra.mxu0 0.0
    %178 = vmatprep.subr.mxu0 0.0
    %179 = vmatpush1.msra.mxu0 0.0
    %180 = vmatprep.subr.mxu0 0.0
    %181 = vmatpush1.msra.mxu0 0.0
    %182 = vmatprep.subr.mxu0 0.0
    %183 = vmatpush1.msra.mxu0 0.0
    %184 = vmatprep.subr.mxu0 0.0
    %185 = vmatpush1.msra.mxu0 0.0
    %186 = vmatprep.subr.mxu0 0.0
    %187 = vmatpush1.msra.mxu0 0.0
    %188 = vmatprep.subr.mxu0 0.0
    %189 = vmatpush1.msra.mxu0 0.0
    %190 = vmatprep.subr.mxu0 0.0
    %191 = vmatpush1.msra.mxu0 0.0
    %192 = vmatprep.subr.mxu0 0.0
    %193 = vmatpush1.msra.mxu0 0.0
    %194 = vmatprep.subr.mxu0 0.0
    %195 = vmatpush1.msra.mxu0 0.0
    %196 = vmatprep.subr.mxu0 0.0
    %197 = vmatpush1.msra.mxu0 0.0
    %198 = vmatprep.subr.mxu0 0.0
    %199 = vmatpush1.msra.mxu0 0.0
    %200 = vmatprep.subr.mxu0 0.0
    %201 = vmatpush1.msra.mxu0 0.0
    %202 = vmatprep.subr.mxu0 0.0
    %203 = vmatpush1.msra.mxu0 0.0
    %204 = vmatprep.subr.mxu0 0.0
    %205 = vmatpush1.msra.mxu0 0.0
    %206 = vmatprep.subr.mxu0 0.0
    %207 = vmatpush1.msra.mxu0 0.0
    %208 = vmatprep.subr.mxu0 0.0
    %209 = vmatpush1.msra.mxu0 0.0
    %210 = vmatprep.subr.mxu0 0.0
    %211 = vmatpush1.msra.mxu0 0.0
    %212 = vmatprep.subr.mxu0 0.0
    %213 = vmatpush1.msra.mxu0 0.0
    %214 = vmatprep.subr.mxu0 0.0
    %215 = vmatpush1.msra.mxu0 0.0
    %216 = vmatprep.subr.mxu0 0.0
    %217 = vmatpush1.msra.mxu0 0.0
    %218 = vmatprep.subr.mxu0 0.0
    %219 = vmatpush1.msra.mxu0 0.0
    %220 = vmatprep.mubr.f32.mxu0 0.0
    %221 = vmatmul.mubr.f32.gmra.mrb[0].mxu0 %v154
    %v222 = vpop.f32.mrb[0].mxu0
    %v223 = vadd.f32 %v151, %v222
    %v224 = vpop.f32.mrb[0].mxu0
    %225 = vdwg.mxu0
    %vm226 = vcmask 31744
    %227 = vst.msk [vmem:[%s2] sm:$0xff] %vm226, %v223
    // Predicated region
    $region14: #{tpu_custom_call.1} parent=1 // pred_check
      _
    $region15: #{tpu_custom_call.1} parent=1 // pred_check_branch
      %229 = sbr.rel (0) target = $region17
    $region16: #{tpu_custom_call.1} parent=1 // pred_region
      _
    $region17: #{tpu_custom_call.1} parent=1 // pred_fallthru
      _
    // Predicated region
    $region18: #{tpu_custom_call.1} parent=1 // pred_check
      _
    $region19: #{tpu_custom_call.1} parent=1 // pred_check_branch
      %231 = sbr.rel (0) target = $region21
    $region20: #{tpu_custom_call.1} parent=1 // pred_region
      _
    $region21: #{tpu_custom_call.1} parent=1 // pred_fallthru
      _
    %232 = vsyncpa [#allocation3], 1

</llo_original>
